<compile_context>
chip_gen: v7x
topology: tpu7x:2x2x1
jax: 0.10.0
libtpu: 0.0.40
codegen_flags: <defaults>
</compile_context>

<pallas_src>
import jax
import jax.numpy as jnp
from jax.experimental import pallas as pl
from jax.experimental.pallas import tpu as pltpu


def viblstm_kernel(x_ref, wih_ref, whh_ref, b_ref, pa_ref, pb_ref, out_ref):
    """Single-invocation VIB-LSTM forward.

    x_ref   : (bs, seq, D)  f32   batch-major input (module's natural layout)
    wih_ref : (D, 4H)       bf16  W_ih^T, i/f/o columns pre-scaled by 0.5
    whh_ref : (H, 4H)       bf16  W_hh^T, i/f/o columns pre-scaled by 0.5
    b_ref   : (1, 4H)       f32   (b_ih + b_hh), i/f/o entries pre-scaled by 0.5
    pa_ref  : (1, 4H)       f32   post-activation multiplier (fuses IB scales)
    pb_ref  : (1, 4H)       f32   post-activation offset     (fuses IB scales)
    out_ref : (bs, seq*H)   f32   lane-dense hidden-sequence output
    """
    bs, seq, D = x_ref.shape
    H = whh_ref.shape[0]
    four_h = whh_ref.shape[1]

    # --- Stage 1 (non-recurrent): input projection for ALL timesteps in one
    #     bf16 MXU matmul (f32 accumulation); bias already folded/pre-scaled.
    x2d = x_ref[...].reshape(bs * seq, D).astype(jnp.bfloat16)
    xg = jnp.dot(x2d, wih_ref[...],
                 preferred_element_type=jnp.float32) + b_ref[...]   # (bs*seq, 4H) f32
    xg = xg.reshape(bs, seq, four_h)                                 # view: (b, t, 4H)

    whh = whh_ref[...]          # (H, 4H) bf16, resident across all steps
    pa = pa_ref[...]            # (1, 4H) f32
    pb = pb_ref[...]            # (1, 4H) f32

    h = jnp.zeros((bs, H), jnp.float32)
    c = jnp.zeros((bs, H), jnp.float32)
    hs = []

    # --- Stage 2 (recurrent): fully unrolled over small static seq.
    # Per-step serial chain: bf16 dot -> add -> tanh (one EUP push for all
    # four gates) -> fused affine -> cell/hidden update.
    for t in range(seq):
        g = xg[:, t, :] + jnp.dot(h.astype(jnp.bfloat16), whh,
                                  preferred_element_type=jnp.float32)  # (bs, 4H)

        # sigmoid(z)*s = tanh(z/2)*(s/2) + s/2  (z/2 folded into weights/bias);
        # tanh(z)*s stays tanh(z)*s + 0.  One tanh covers all four gates.
        a = jnp.tanh(g) * pa + pb

        i_t = a[:, 0 * H:1 * H]
        f_t = a[:, 1 * H:2 * H]
        g_t = a[:, 2 * H:3 * H]
        o_t = a[:, 3 * H:4 * H]

        c = f_t * c + i_t * g_t
        h = o_t * jnp.tanh(c)
        hs.append(h)

    # Single lane-dense (bs, seq*H) store instead of `seq` masked 32-lane stores.
    out_ref[...] = jnp.concatenate(hs, axis=1)


def prepare_params(w_ih, w_hh, b_ih, b_hh, ib_scales):
    """One-time (init-time) parameter preprocessing. Not executed per call."""
    H = w_hh.shape[1]
    s_list = [s.reshape(1, H).astype(jnp.float32) for s in ib_scales]  # i, f, g, o
    s_i, s_f, s_g, s_o = s_list

    # sigmoid(x) = 0.5*(1 + tanh(0.5*x)): fold the 0.5 pre-scale into the
    # i/f/o gate columns of the weights and bias (cell/tanh gate keeps 1.0).
    half = jnp.full((1, H), 0.5, jnp.float32)
    one = jnp.ones((1, H), jnp.float32)
    pre = jnp.concatenate([half, half, one, half], axis=1)             # (1, 4H)

    wih_t = (w_ih.T.astype(jnp.float32) * pre).astype(jnp.bfloat16)   # (D, 4H)
    whh_t = (w_hh.T.astype(jnp.float32) * pre).astype(jnp.bfloat16)   # (H, 4H)
    bias = (b_ih + b_hh).reshape(1, 4 * H).astype(jnp.float32) * pre  # (1, 4H)

    # Post-activation affine fusing the four IB gate scales:
    #   sigmoid gates: tanh(.)*(0.5*s) + 0.5*s ; cell gate: tanh(.)*s + 0
    zeros = jnp.zeros((1, H), jnp.float32)
    post_a = jnp.concatenate([0.5 * s_i, 0.5 * s_f, s_g, 0.5 * s_o], axis=1)
    post_b = jnp.concatenate([0.5 * s_i, 0.5 * s_f, zeros, 0.5 * s_o], axis=1)
    return wih_t, whh_t, bias, post_a, post_b


def make_lstm_forward(w_ih, w_hh, b_ih, b_hh, ib_scales, bs, seq):
    """Builds the forward callable; all param prep + pallas_call setup done once."""
    D = w_ih.shape[1]
    H = w_hh.shape[1]
    wih_t, whh_t, bias, post_a, post_b = prepare_params(
        w_ih, w_hh, b_ih, b_hh, ib_scales)

    # All-resident single-step grid: everything (< 100 KB here) fits VMEM
    # comfortably.  If seq/bs/D/H are scaled up, tile stage 1 over a grid axis
    # (and set vmem_limit_bytes) — v7x's 64 MiB VMEM is the first limit hit.
    grid_spec = pltpu.PrefetchScalarGridSpec(
        num_scalar_prefetch=0,
        grid=(1,),
        in_specs=[
            pl.BlockSpec((bs, seq, D), lambda i: (0, 0, 0)),   # x (batch-major)
            pl.BlockSpec((D, 4 * H), lambda i: (0, 0)),        # W_ih^T (bf16, resident)
            pl.BlockSpec((H, 4 * H), lambda i: (0, 0)),        # W_hh^T (bf16, resident)
            pl.BlockSpec((1, 4 * H), lambda i: (0, 0)),        # fused / pre-scaled bias
            pl.BlockSpec((1, 4 * H), lambda i: (0, 0)),        # post_a (IB scales)
            pl.BlockSpec((1, 4 * H), lambda i: (0, 0)),        # post_b (IB scales)
        ],
        out_specs=pl.BlockSpec((bs, seq * H), lambda i: (0, 0)),  # lane-dense output
        scratch_shapes=[],
    )

    kernel_call = pl.pallas_call(
        viblstm_kernel,
        grid_spec=grid_spec,
        out_shape=jax.ShapeDtypeStruct((bs, seq * H), jnp.float32),
        compiler_params=pltpu.CompilerParams(
            dimension_semantics=("arbitrary",)),
    )

    @jax.jit
    def forward(x):
        out = kernel_call(x.astype(jnp.float32), wih_t, whh_t, bias, post_a, post_b)
        return out.reshape(bs, seq, H)          # free view of the lane-dense slab

    return forward


def viblstm_reference(x, w_ih, w_hh, b_ih, b_hh, ib_scales,
                      matmul_dtype=jnp.float32):
    """Pure-JAX reference mirroring VIBLSTM.forward (e2e=False).

    matmul_dtype=bfloat16 mimics the kernel's bf16 MXU operands (f32 accum)
    for a tight numerical comparison; float32 gives the exact PyTorch math.
    """
    bs, seq, D = x.shape
    H = w_hh.shape[1]
    s0, s1, s2, s3 = ib_scales
    wih_t = w_ih.T.astype(matmul_dtype)
    whh_t = w_hh.T.astype(matmul_dtype)
    bias = (b_ih + b_hh).astype(jnp.float32)

    def step(carry, x_t):
        h, c = carry
        g = (jnp.dot(x_t.astype(matmul_dtype), wih_t,
                     preferred_element_type=jnp.float32)
             + jnp.dot(h.astype(matmul_dtype), whh_t,
                       preferred_element_type=jnp.float32)
             + bias)
        i = jax.nn.sigmoid(g[:, 0:H]) * s0
        f = jax.nn.sigmoid(g[:, H:2 * H]) * s1
        gg = jnp.tanh(g[:, 2 * H:3 * H]) * s2
        o = jax.nn.sigmoid(g[:, 3 * H:4 * H]) * s3
        c = f * c + i * gg
        h = o * jnp.tanh(c)
        return (h, c), h

    init = (jnp.zeros((bs, H), jnp.float32), jnp.zeros((bs, H), jnp.float32))
    _, hs = jax.lax.scan(step, init, jnp.transpose(x, (1, 0, 2)))
    return jnp.transpose(hs, (1, 0, 2))


def xavier_uniform(key, shape):
    fan_out, fan_in = shape
    bound = jnp.sqrt(6.0 / (fan_in + fan_out))
    return jax.random.uniform(key, shape, jnp.float32, -bound, bound)


if __name__ == "__main__":
    # LSTM(latent_dim=16, num_layers=1, hidden_dim=32, kml=1, masking=False, e2e=False)
    latent_dim, hidden_dim = 16, 32
    bs, seq = 2, 8

    key = jax.random.PRNGKey(0)
    k_x, k_wih, k_whh, k_s0, k_s1, k_s2, k_s3 = jax.random.split(key, 7)

    x = jax.random.normal(k_x, (bs, seq, latent_dim), jnp.float32)

    # VIBLSTM.init_weights: xavier_uniform for 2-D params, zeros for biases.
    w_ih = xavier_uniform(k_wih, (4 * hidden_dim, latent_dim))
    w_hh = xavier_uniform(k_whh, (4 * hidden_dim, hidden_dim))
    b_ih = jnp.zeros((4 * hidden_dim,), jnp.float32)
    b_hh = jnp.zeros((4 * hidden_dim,), jnp.float32)

    # Deterministic per-feature IB scales (stand-in for ib0..ib3 eval forward).
    ib_scales = [
        jax.random.uniform(k, (hidden_dim,), jnp.float32, 0.5, 1.5)
        for k in (k_s0, k_s1, k_s2, k_s3)
    ]

    # Module "init": all parameter preprocessing happens once here.
    forward = make_lstm_forward(w_ih, w_hh, b_ih, b_hh, ib_scales, bs=bs, seq=seq)

    out = jax.block_until_ready(forward(x))
    assert out.shape == (bs, seq, hidden_dim)

    # Tight check vs a reference that mirrors the kernel's bf16 MXU operands.
    ref_bf16 = viblstm_reference(x, w_ih, w_hh, b_ih, b_hh, ib_scales,
                                 matmul_dtype=jnp.bfloat16)
    assert jnp.allclose(out, ref_bf16, atol=1e-3, rtol=1e-3), \
        "mismatch vs bf16-matched reference"

    # Looser check vs the exact f32 PyTorch math (bf16 operand rounding only).
    ref_f32 = viblstm_reference(x, w_ih, w_hh, b_ih, b_hh, ib_scales)
    assert jnp.allclose(out, ref_f32, atol=5e-2, rtol=5e-2), \
        "mismatch vs f32 reference"

    print("KERNEL_OK")
</pallas_src>

<mosaic_0001>
module attributes {stable_mosaic.version = 11 : i64} {
  func.func @viblstm_kernel(%arg0: i32, %arg1: memref<2x8x16xf32, #tpu.memory_space<vmem>>, %arg2: memref<16x128xbf16, #tpu.memory_space<vmem>>, %arg3: memref<32x128xbf16, #tpu.memory_space<vmem>>, %arg4: memref<1x128xf32, #tpu.memory_space<vmem>>, %arg5: memref<1x128xf32, #tpu.memory_space<vmem>>, %arg6: memref<1x128xf32, #tpu.memory_space<vmem>>, %arg7: memref<2x256xf32, #tpu.memory_space<vmem>>) attributes {dimension_semantics = [#tpu.dimension_semantics<arbitrary>], iteration_bounds = array<i64: 1>, scalar_prefetch = 0 : i64, scratch_operands = 0 : i64, tpu.core_type = #tpu.core_type<tc>, window_params = [{pipeline_mode = #tpu.pipeline_mode<synchronous>, transform_indices = @transform_0, window_bounds = array<i64: 2, 8, 16>}, {pipeline_mode = #tpu.pipeline_mode<synchronous>, transform_indices = @transform_1, window_bounds = array<i64: 16, 128>}, {pipeline_mode = #tpu.pipeline_mode<synchronous>, transform_indices = @transform_2, window_bounds = array<i64: 32, 128>}, {pipeline_mode = #tpu.pipeline_mode<synchronous>, transform_indices = @transform_3, window_bounds = array<i64: 1, 128>}, {pipeline_mode = #tpu.pipeline_mode<synchronous>, transform_indices = @transform_4, window_bounds = array<i64: 1, 128>}, {pipeline_mode = #tpu.pipeline_mode<synchronous>, transform_indices = @transform_5, window_bounds = array<i64: 1, 128>}, {pipeline_mode = #tpu.pipeline_mode<synchronous>, transform_indices = @transform_6, window_bounds = array<i64: 2, 256>}]} {
    %c0 = arith.constant 0 : index
    %c0_0 = arith.constant 0 : index
    %c0_1 = arith.constant 0 : index
    %0 = vector.load %arg1[%c0, %c0_0, %c0_1] : memref<2x8x16xf32, #tpu.memory_space<vmem>>, vector<2x8x16xf32>
    %1 = vector.shape_cast %0 : vector<2x8x16xf32> to vector<16x16xf32>
    %2 = arith.truncf %1 : vector<16x16xf32> to vector<16x16xbf16>
    %c0_2 = arith.constant 0 : index
    %c0_3 = arith.constant 0 : index
    %3 = vector.load %arg2[%c0_2, %c0_3] : memref<16x128xbf16, #tpu.memory_space<vmem>>, vector<16x128xbf16>
    %cst = arith.constant dense<0.000000e+00> : vector<16x128xf32>
    %4 = tpu.matmul %2, %3, %cst {dimension_numbers = #tpu.dot_dimension_numbers<[1], [0], [0], [1], [0, 0, 1, 1], [], []>} : vector<16x16xbf16>, vector<16x128xbf16>, vector<16x128xf32> -> vector<16x128xf32>
    %c0_4 = arith.constant 0 : index
    %c0_5 = arith.constant 0 : index
    %5 = vector.load %arg4[%c0_4, %c0_5] : memref<1x128xf32, #tpu.memory_space<vmem>>, vector<1x128xf32>
    %6 = vector.broadcast %5 : vector<1x128xf32> to vector<16x128xf32>
    %7 = arith.addf %4, %6 : vector<16x128xf32>
    %8 = vector.shape_cast %7 : vector<16x128xf32> to vector<2x8x128xf32>
    %c0_6 = arith.constant 0 : index
    %c0_7 = arith.constant 0 : index
    %9 = vector.load %arg3[%c0_6, %c0_7] : memref<32x128xbf16, #tpu.memory_space<vmem>>, vector<32x128xbf16>
    %c0_8 = arith.constant 0 : index
    %c0_9 = arith.constant 0 : index
    %10 = vector.load %arg5[%c0_8, %c0_9] : memref<1x128xf32, #tpu.memory_space<vmem>>, vector<1x128xf32>
    %c0_10 = arith.constant 0 : index
    %c0_11 = arith.constant 0 : index
    %11 = vector.load %arg6[%c0_10, %c0_11] : memref<1x128xf32, #tpu.memory_space<vmem>>, vector<1x128xf32>
    %cst_12 = arith.constant 0.000000e+00 : f32
    %12 = vector.broadcast %cst_12 : f32 to vector<2x32xf32>
    %cst_13 = arith.constant 0.000000e+00 : f32
    %13 = vector.broadcast %cst_13 : f32 to vector<2x32xf32>
    %14 = vector.extract_strided_slice %8 {offsets = [0, 0, 0], sizes = [2, 1, 128], strides = [1, 1, 1]} : vector<2x8x128xf32> to vector<2x1x128xf32>
    %15 = vector.shape_cast %14 : vector<2x1x128xf32> to vector<2x128xf32>
    %16 = arith.truncf %12 : vector<2x32xf32> to vector<2x32xbf16>
    %cst_14 = arith.constant dense<0.000000e+00> : vector<2x128xf32>
    %17 = tpu.matmul %16, %9, %cst_14 {dimension_numbers = #tpu.dot_dimension_numbers<[1], [0], [0], [1], [0, 0, 1, 1], [], []>} : vector<2x32xbf16>, vector<32x128xbf16>, vector<2x128xf32> -> vector<2x128xf32>
    %18 = arith.addf %15, %17 : vector<2x128xf32>
    %19 = math.tanh %18 : vector<2x128xf32>
    %20 = vector.broadcast %10 : vector<1x128xf32> to vector<2x128xf32>
    %21 = arith.mulf %19, %20 : vector<2x128xf32>
    %22 = vector.broadcast %11 : vector<1x128xf32> to vector<2x128xf32>
    %23 = arith.addf %21, %22 : vector<2x128xf32>
    %24 = vector.extract_strided_slice %23 {offsets = [0, 0], sizes = [2, 32], strides = [1, 1]} : vector<2x128xf32> to vector<2x32xf32>
    %25 = vector.extract_strided_slice %23 {offsets = [0, 32], sizes = [2, 32], strides = [1, 1]} : vector<2x128xf32> to vector<2x32xf32>
    %26 = vector.extract_strided_slice %23 {offsets = [0, 64], sizes = [2, 32], strides = [1, 1]} : vector<2x128xf32> to vector<2x32xf32>
    %27 = vector.extract_strided_slice %23 {offsets = [0, 96], sizes = [2, 32], strides = [1, 1]} : vector<2x128xf32> to vector<2x32xf32>
    %28 = arith.mulf %25, %13 : vector<2x32xf32>
    %29 = arith.mulf %24, %26 : vector<2x32xf32>
    %30 = arith.addf %28, %29 : vector<2x32xf32>
    %31 = math.tanh %30 : vector<2x32xf32>
    %32 = arith.mulf %27, %31 : vector<2x32xf32>
    %33 = vector.extract_strided_slice %8 {offsets = [0, 1, 0], sizes = [2, 1, 128], strides = [1, 1, 1]} : vector<2x8x128xf32> to vector<2x1x128xf32>
    %34 = vector.shape_cast %33 : vector<2x1x128xf32> to vector<2x128xf32>
    %35 = arith.truncf %32 : vector<2x32xf32> to vector<2x32xbf16>
    %cst_15 = arith.constant dense<0.000000e+00> : vector<2x128xf32>
    %36 = tpu.matmul %35, %9, %cst_15 {dimension_numbers = #tpu.dot_dimension_numbers<[1], [0], [0], [1], [0, 0, 1, 1], [], []>} : vector<2x32xbf16>, vector<32x128xbf16>, vector<2x128xf32> -> vector<2x128xf32>
    %37 = arith.addf %34, %36 : vector<2x128xf32>
    %38 = math.tanh %37 : vector<2x128xf32>
    %39 = vector.broadcast %10 : vector<1x128xf32> to vector<2x128xf32>
    %40 = arith.mulf %38, %39 : vector<2x128xf32>
    %41 = vector.broadcast %11 : vector<1x128xf32> to vector<2x128xf32>
    %42 = arith.addf %40, %41 : vector<2x128xf32>
    %43 = vector.extract_strided_slice %42 {offsets = [0, 0], sizes = [2, 32], strides = [1, 1]} : vector<2x128xf32> to vector<2x32xf32>
    %44 = vector.extract_strided_slice %42 {offsets = [0, 32], sizes = [2, 32], strides = [1, 1]} : vector<2x128xf32> to vector<2x32xf32>
    %45 = vector.extract_strided_slice %42 {offsets = [0, 64], sizes = [2, 32], strides = [1, 1]} : vector<2x128xf32> to vector<2x32xf32>
    %46 = vector.extract_strided_slice %42 {offsets = [0, 96], sizes = [2, 32], strides = [1, 1]} : vector<2x128xf32> to vector<2x32xf32>
    %47 = arith.mulf %44, %30 : vector<2x32xf32>
    %48 = arith.mulf %43, %45 : vector<2x32xf32>
    %49 = arith.addf %47, %48 : vector<2x32xf32>
    %50 = math.tanh %49 : vector<2x32xf32>
    %51 = arith.mulf %46, %50 : vector<2x32xf32>
    %52 = vector.extract_strided_slice %8 {offsets = [0, 2, 0], sizes = [2, 1, 128], strides = [1, 1, 1]} : vector<2x8x128xf32> to vector<2x1x128xf32>
    %53 = vector.shape_cast %52 : vector<2x1x128xf32> to vector<2x128xf32>
    %54 = arith.truncf %51 : vector<2x32xf32> to vector<2x32xbf16>
    %cst_16 = arith.constant dense<0.000000e+00> : vector<2x128xf32>
    %55 = tpu.matmul %54, %9, %cst_16 {dimension_numbers = #tpu.dot_dimension_numbers<[1], [0], [0], [1], [0, 0, 1, 1], [], []>} : vector<2x32xbf16>, vector<32x128xbf16>, vector<2x128xf32> -> vector<2x128xf32>
    %56 = arith.addf %53, %55 : vector<2x128xf32>
    %57 = math.tanh %56 : vector<2x128xf32>
    %58 = vector.broadcast %10 : vector<1x128xf32> to vector<2x128xf32>
    %59 = arith.mulf %57, %58 : vector<2x128xf32>
    %60 = vector.broadcast %11 : vector<1x128xf32> to vector<2x128xf32>
    %61 = arith.addf %59, %60 : vector<2x128xf32>
    %62 = vector.extract_strided_slice %61 {offsets = [0, 0], sizes = [2, 32], strides = [1, 1]} : vector<2x128xf32> to vector<2x32xf32>
    %63 = vector.extract_strided_slice %61 {offsets = [0, 32], sizes = [2, 32], strides = [1, 1]} : vector<2x128xf32> to vector<2x32xf32>
    %64 = vector.extract_strided_slice %61 {offsets = [0, 64], sizes = [2, 32], strides = [1, 1]} : vector<2x128xf32> to vector<2x32xf32>
    %65 = vector.extract_strided_slice %61 {offsets = [0, 96], sizes = [2, 32], strides = [1, 1]} : vector<2x128xf32> to vector<2x32xf32>
    %66 = arith.mulf %63, %49 : vector<2x32xf32>
    %67 = arith.mulf %62, %64 : vector<2x32xf32>
    %68 = arith.addf %66, %67 : vector<2x32xf32>
    %69 = math.tanh %68 : vector<2x32xf32>
    %70 = arith.mulf %65, %69 : vector<2x32xf32>
    %71 = vector.extract_strided_slice %8 {offsets = [0, 3, 0], sizes = [2, 1, 128], strides = [1, 1, 1]} : vector<2x8x128xf32> to vector<2x1x128xf32>
    %72 = vector.shape_cast %71 : vector<2x1x128xf32> to vector<2x128xf32>
    %73 = arith.truncf %70 : vector<2x32xf32> to vector<2x32xbf16>
    %cst_17 = arith.constant dense<0.000000e+00> : vector<2x128xf32>
    %74 = tpu.matmul %73, %9, %cst_17 {dimension_numbers = #tpu.dot_dimension_numbers<[1], [0], [0], [1], [0, 0, 1, 1], [], []>} : vector<2x32xbf16>, vector<32x128xbf16>, vector<2x128xf32> -> vector<2x128xf32>
    %75 = arith.addf %72, %74 : vector<2x128xf32>
    %76 = math.tanh %75 : vector<2x128xf32>
    %77 = vector.broadcast %10 : vector<1x128xf32> to vector<2x128xf32>
    %78 = arith.mulf %76, %77 : vector<2x128xf32>
    %79 = vector.broadcast %11 : vector<1x128xf32> to vector<2x128xf32>
    %80 = arith.addf %78, %79 : vector<2x128xf32>
    %81 = vector.extract_strided_slice %80 {offsets = [0, 0], sizes = [2, 32], strides = [1, 1]} : vector<2x128xf32> to vector<2x32xf32>
    %82 = vector.extract_strided_slice %80 {offsets = [0, 32], sizes = [2, 32], strides = [1, 1]} : vector<2x128xf32> to vector<2x32xf32>
    %83 = vector.extract_strided_slice %80 {offsets = [0, 64], sizes = [2, 32], strides = [1, 1]} : vector<2x128xf32> to vector<2x32xf32>
    %84 = vector.extract_strided_slice %80 {offsets = [0, 96], sizes = [2, 32], strides = [1, 1]} : vector<2x128xf32> to vector<2x32xf32>
    %85 = arith.mulf %82, %68 : vector<2x32xf32>
    %86 = arith.mulf %81, %83 : vector<2x32xf32>
    %87 = arith.addf %85, %86 : vector<2x32xf32>
    %88 = math.tanh %87 : vector<2x32xf32>
    %89 = arith.mulf %84, %88 : vector<2x32xf32>
    %90 = vector.extract_strided_slice %8 {offsets = [0, 4, 0], sizes = [2, 1, 128], strides = [1, 1, 1]} : vector<2x8x128xf32> to vector<2x1x128xf32>
    %91 = vector.shape_cast %90 : vector<2x1x128xf32> to vector<2x128xf32>
    %92 = arith.truncf %89 : vector<2x32xf32> to vector<2x32xbf16>
    %cst_18 = arith.constant dense<0.000000e+00> : vector<2x128xf32>
    %93 = tpu.matmul %92, %9, %cst_18 {dimension_numbers = #tpu.dot_dimension_numbers<[1], [0], [0], [1], [0, 0, 1, 1], [], []>} : vector<2x32xbf16>, vector<32x128xbf16>, vector<2x128xf32> -> vector<2x128xf32>
    %94 = arith.addf %91, %93 : vector<2x128xf32>
    %95 = math.tanh %94 : vector<2x128xf32>
    %96 = vector.broadcast %10 : vector<1x128xf32> to vector<2x128xf32>
    %97 = arith.mulf %95, %96 : vector<2x128xf32>
    %98 = vector.broadcast %11 : vector<1x128xf32> to vector<2x128xf32>
    %99 = arith.addf %97, %98 : vector<2x128xf32>
    %100 = vector.extract_strided_slice %99 {offsets = [0, 0], sizes = [2, 32], strides = [1, 1]} : vector<2x128xf32> to vector<2x32xf32>
    %101 = vector.extract_strided_slice %99 {offsets = [0, 32], sizes = [2, 32], strides = [1, 1]} : vector<2x128xf32> to vector<2x32xf32>
    %102 = vector.extract_strided_slice %99 {offsets = [0, 64], sizes = [2, 32], strides = [1, 1]} : vector<2x128xf32> to vector<2x32xf32>
    %103 = vector.extract_strided_slice %99 {offsets = [0, 96], sizes = [2, 32], strides = [1, 1]} : vector<2x128xf32> to vector<2x32xf32>
    %104 = arith.mulf %101, %87 : vector<2x32xf32>
    %105 = arith.mulf %100, %102 : vector<2x32xf32>
    %106 = arith.addf %104, %105 : vector<2x32xf32>
    %107 = math.tanh %106 : vector<2x32xf32>
    %108 = arith.mulf %103, %107 : vector<2x32xf32>
    %109 = vector.extract_strided_slice %8 {offsets = [0, 5, 0], sizes = [2, 1, 128], strides = [1, 1, 1]} : vector<2x8x128xf32> to vector<2x1x128xf32>
    %110 = vector.shape_cast %109 : vector<2x1x128xf32> to vector<2x128xf32>
    %111 = arith.truncf %108 : vector<2x32xf32> to vector<2x32xbf16>
    %cst_19 = arith.constant dense<0.000000e+00> : vector<2x128xf32>
    %112 = tpu.matmul %111, %9, %cst_19 {dimension_numbers = #tpu.dot_dimension_numbers<[1], [0], [0], [1], [0, 0, 1, 1], [], []>} : vector<2x32xbf16>, vector<32x128xbf16>, vector<2x128xf32> -> vector<2x128xf32>
    %113 = arith.addf %110, %112 : vector<2x128xf32>
    %114 = math.tanh %113 : vector<2x128xf32>
    %115 = vector.broadcast %10 : vector<1x128xf32> to vector<2x128xf32>
    %116 = arith.mulf %114, %115 : vector<2x128xf32>
    %117 = vector.broadcast %11 : vector<1x128xf32> to vector<2x128xf32>
    %118 = arith.addf %116, %117 : vector<2x128xf32>
    %119 = vector.extract_strided_slice %118 {offsets = [0, 0], sizes = [2, 32], strides = [1, 1]} : vector<2x128xf32> to vector<2x32xf32>
    %120 = vector.extract_strided_slice %118 {offsets = [0, 32], sizes = [2, 32], strides = [1, 1]} : vector<2x128xf32> to vector<2x32xf32>
    %121 = vector.extract_strided_slice %118 {offsets = [0, 64], sizes = [2, 32], strides = [1, 1]} : vector<2x128xf32> to vector<2x32xf32>
    %122 = vector.extract_strided_slice %118 {offsets = [0, 96], sizes = [2, 32], strides = [1, 1]} : vector<2x128xf32> to vector<2x32xf32>
    %123 = arith.mulf %120, %106 : vector<2x32xf32>
    %124 = arith.mulf %119, %121 : vector<2x32xf32>
    %125 = arith.addf %123, %124 : vector<2x32xf32>
    %126 = math.tanh %125 : vector<2x32xf32>
    %127 = arith.mulf %122, %126 : vector<2x32xf32>
    %128 = vector.extract_strided_slice %8 {offsets = [0, 6, 0], sizes = [2, 1, 128], strides = [1, 1, 1]} : vector<2x8x128xf32> to vector<2x1x128xf32>
    %129 = vector.shape_cast %128 : vector<2x1x128xf32> to vector<2x128xf32>
    %130 = arith.truncf %127 : vector<2x32xf32> to vector<2x32xbf16>
    %cst_20 = arith.constant dense<0.000000e+00> : vector<2x128xf32>
    %131 = tpu.matmul %130, %9, %cst_20 {dimension_numbers = #tpu.dot_dimension_numbers<[1], [0], [0], [1], [0, 0, 1, 1], [], []>} : vector<2x32xbf16>, vector<32x128xbf16>, vector<2x128xf32> -> vector<2x128xf32>
    %132 = arith.addf %129, %131 : vector<2x128xf32>
    %133 = math.tanh %132 : vector<2x128xf32>
    %134 = vector.broadcast %10 : vector<1x128xf32> to vector<2x128xf32>
    %135 = arith.mulf %133, %134 : vector<2x128xf32>
    %136 = vector.broadcast %11 : vector<1x128xf32> to vector<2x128xf32>
    %137 = arith.addf %135, %136 : vector<2x128xf32>
    %138 = vector.extract_strided_slice %137 {offsets = [0, 0], sizes = [2, 32], strides = [1, 1]} : vector<2x128xf32> to vector<2x32xf32>
    %139 = vector.extract_strided_slice %137 {offsets = [0, 32], sizes = [2, 32], strides = [1, 1]} : vector<2x128xf32> to vector<2x32xf32>
    %140 = vector.extract_strided_slice %137 {offsets = [0, 64], sizes = [2, 32], strides = [1, 1]} : vector<2x128xf32> to vector<2x32xf32>
    %141 = vector.extract_strided_slice %137 {offsets = [0, 96], sizes = [2, 32], strides = [1, 1]} : vector<2x128xf32> to vector<2x32xf32>
    %142 = arith.mulf %139, %125 : vector<2x32xf32>
    %143 = arith.mulf %138, %140 : vector<2x32xf32>
    %144 = arith.addf %142, %143 : vector<2x32xf32>
    %145 = math.tanh %144 : vector<2x32xf32>
    %146 = arith.mulf %141, %145 : vector<2x32xf32>
    %147 = vector.extract_strided_slice %8 {offsets = [0, 7, 0], sizes = [2, 1, 128], strides = [1, 1, 1]} : vector<2x8x128xf32> to vector<2x1x128xf32>
    %148 = vector.shape_cast %147 : vector<2x1x128xf32> to vector<2x128xf32>
    %149 = arith.truncf %146 : vector<2x32xf32> to vector<2x32xbf16>
    %cst_21 = arith.constant dense<0.000000e+00> : vector<2x128xf32>
    %150 = tpu.matmul %149, %9, %cst_21 {dimension_numbers = #tpu.dot_dimension_numbers<[1], [0], [0], [1], [0, 0, 1, 1], [], []>} : vector<2x32xbf16>, vector<32x128xbf16>, vector<2x128xf32> -> vector<2x128xf32>
    %151 = arith.addf %148, %150 : vector<2x128xf32>
    %152 = math.tanh %151 : vector<2x128xf32>
    %153 = vector.broadcast %10 : vector<1x128xf32> to vector<2x128xf32>
    %154 = arith.mulf %152, %153 : vector<2x128xf32>
    %155 = vector.broadcast %11 : vector<1x128xf32> to vector<2x128xf32>
    %156 = arith.addf %154, %155 : vector<2x128xf32>
    %157 = vector.extract_strided_slice %156 {offsets = [0, 0], sizes = [2, 32], strides = [1, 1]} : vector<2x128xf32> to vector<2x32xf32>
    %158 = vector.extract_strided_slice %156 {offsets = [0, 32], sizes = [2, 32], strides = [1, 1]} : vector<2x128xf32> to vector<2x32xf32>
    %159 = vector.extract_strided_slice %156 {offsets = [0, 64], sizes = [2, 32], strides = [1, 1]} : vector<2x128xf32> to vector<2x32xf32>
    %160 = vector.extract_strided_slice %156 {offsets = [0, 96], sizes = [2, 32], strides = [1, 1]} : vector<2x128xf32> to vector<2x32xf32>
    %161 = arith.mulf %158, %144 : vector<2x32xf32>
    %162 = arith.mulf %157, %159 : vector<2x32xf32>
    %163 = arith.addf %161, %162 : vector<2x32xf32>
    %164 = math.tanh %163 : vector<2x32xf32>
    %165 = arith.mulf %160, %164 : vector<2x32xf32>
    %166 = tpu.concatenate %32, %51, %70, %89, %108, %127, %146, %165 in 1 : vector<2x32xf32>, vector<2x32xf32>, vector<2x32xf32>, vector<2x32xf32>, vector<2x32xf32>, vector<2x32xf32>, vector<2x32xf32>, vector<2x32xf32> -> vector<2x256xf32>
    %c0_22 = arith.constant 0 : index
    %c0_23 = arith.constant 0 : index
    %167 = vector.load %arg7[%c0_22, %c0_23] : memref<2x256xf32, #tpu.memory_space<vmem>>, vector<2x256xf32>
    tpu.vector_store %arg7[%c0_22, %c0_23], %166 {strides = array<i32>} : memref<2x256xf32, #tpu.memory_space<vmem>>, vector<2x256xf32>,
    return
  }
  func.func @transform_0(%arg0: i32) -> (i32, i32, i32) {
    %c0_i32 = arith.constant 0 : i32
    %c0_i32_0 = arith.constant 0 : i32
    %c0_i32_1 = arith.constant 0 : i32
    %c0_i32_2 = arith.constant 0 : i32
    return %c0_i32, %c0_i32_0, %c0_i32_1 : i32, i32, i32
  }
  func.func @transform_1(%arg0: i32) -> (i32, i32) {
    %c0_i32 = arith.constant 0 : i32
    %c0_i32_0 = arith.constant 0 : i32
    %c0_i32_1 = arith.constant 0 : i32
    return %c0_i32, %c0_i32_0 : i32, i32
  }
  func.func @transform_2(%arg0: i32) -> (i32, i32) {
    %c0_i32 = arith.constant 0 : i32
    %c0_i32_0 = arith.constant 0 : i32
    %c0_i32_1 = arith.constant 0 : i32
    return %c0_i32, %c0_i32_0 : i32, i32
  }
  func.func @transform_3(%arg0: i32) -> (i32, i32) {
    %c0_i32 = arith.constant 0 : i32
    %c0_i32_0 = arith.constant 0 : i32
    %c0_i32_1 = arith.constant 0 : i32
    return %c0_i32, %c0_i32_0 : i32, i32
  }
  func.func @transform_4(%arg0: i32) -> (i32, i32) {
    %c0_i32 = arith.constant 0 : i32
    %c0_i32_0 = arith.constant 0 : i32
    %c0_i32_1 = arith.constant 0 : i32
    return %c0_i32, %c0_i32_0 : i32, i32
  }
  func.func @transform_5(%arg0: i32) -> (i32, i32) {
    %c0_i32 = arith.constant 0 : i32
    %c0_i32_0 = arith.constant 0 : i32
    %c0_i32_1 = arith.constant 0 : i32
    return %c0_i32, %c0_i32_0 : i32, i32
  }
  func.func @transform_6(%arg0: i32) -> (i32, i32) {
    %c0_i32 = arith.constant 0 : i32
    %c0_i32_0 = arith.constant 0 : i32
    %c0_i32_1 = arith.constant 0 : i32
    return %c0_i32, %c0_i32_0 : i32, i32
  }
}

</mosaic_0001>

<llo_original>
// kernel: forward.1
$region0: #{forward.1}
  #allocation0 [shape = 'u32[]', space=smem, size = 0x4, offset = 0x4, fixed_abs, tag = 'smem constant byte address 0x4 - core index']
  #allocation1 [shape = 'u32[144,128]{1,0:T(1,128)}', space=vmem, size = 0x12000, scoped, tag = 'internal scratch']
  %s0 = inlined_call_operand.hbm [shape: f32[2,8,16], index: 0, kind: input, shape index: {}]
  %s1 = inlined_call_operand.vmem [shape: bf16[16,128], index: 1, kind: input, shape index: {}]
  %s2 = inlined_call_operand.vmem [shape: bf16[32,128], index: 2, kind: input, shape index: {}]
  %s3 = inlined_call_operand.vmem [shape: f32[1,128], index: 3, kind: input, shape index: {}]
  %s4 = inlined_call_operand.vmem [shape: f32[1,128], index: 4, kind: input, shape index: {}]
  %s5 = inlined_call_operand.vmem [shape: f32[1,128], index: 5, kind: input, shape index: {}]
  %s6 = inlined_call_operand.vmem [shape: f32[2,256], index: 6, kind: output, shape index: {}]
  %s7 = sld [smem:[#allocation0]]
  $region38: #{forward.1} parent=0
    _
  %s9 = ssub.s32 1, %s7
  %s10 = scalar_select 0, %s9, %s7
  $region1: #{forward.1} parent=0
    #allocation2 [shape = 'u8[8192]{0}', space=vmem, size = 0x2000, scoped, tag = 'input window, operand 0, single buffered']
    #allocation3 [shape = 's32[1]{0}', space=sflag, size = 0x4, scoped, tag = 'scoped memory for forward.1']
    %11 = vsyncpa [#allocation3], 0
    // Predicated region
    $region2: #{forward.1} parent=1 // pred_check
      _
    $region3: #{forward.1} parent=1 // pred_check_branch
      %13 = sbr.rel (0) target = $region5
    $region4: #{forward.1} parent=1 // pred_region
      %s15 = ssub.s32 256, 256
      %16 = vsyncadd [#allocation3], %s15
      %s17 = sshll.u32 [#allocation2], 4
      %s18 = int_to_ptr.vmem [resolvable:$true] %s17
      %23 = dma.hbm_to_vmem [thread:$0]  %s0, 256, %s18, [#allocation3], 128, 128, 8
    $region5: #{forward.1} parent=1 // pred_fallthru
      _
    // Predicated region
    $region6: #{forward.1} parent=1 // pred_check
      _
    $region7: #{forward.1} parent=1 // pred_check_branch
      %25 = sbr.rel (0) target = $region9
    $region8: #{forward.1} parent=1 // pred_region
      _
    $region9: #{forward.1} parent=1 // pred_fallthru
      _
    // Predicated region
    $region10: #{forward.1} parent=1 // pred_check
      _
    $region11: #{forward.1} parent=1 // pred_check_branch
      %27 = sbr.rel (0) target = $region13
    $region12: #{forward.1} parent=1 // pred_region
      _
    $region13: #{forward.1} parent=1 // pred_fallthru
      _
    // Predicated region
    $region14: #{forward.1} parent=1 // pred_check
      _
    $region15: #{forward.1} parent=1 // pred_check_branch
      %29 = sbr.rel (0) target = $region17
    $region16: #{forward.1} parent=1 // pred_region
      _
    $region17: #{forward.1} parent=1 // pred_fallthru
      _
    // Predicated region
    $region18: #{forward.1} parent=1 // pred_check
      _
    $region19: #{forward.1} parent=1 // pred_check_branch
      %31 = sbr.rel (0) target = $region21
    $region20: #{forward.1} parent=1 // pred_region
      _
    $region21: #{forward.1} parent=1 // pred_fallthru
      _
    // Predicated region
    $region22: #{forward.1} parent=1 // pred_check
      _
    $region23: #{forward.1} parent=1 // pred_check_branch
      %33 = sbr.rel (0) target = $region25
    $region24: #{forward.1} parent=1 // pred_region
      _
    $region25: #{forward.1} parent=1 // pred_fallthru
      _
    // Predicated region
    $region26: #{forward.1} parent=1 // pred_check
      _
    $region27: #{forward.1} parent=1 // pred_check_branch
      %35 = sbr.rel (0) target = $region29
    $region28: #{forward.1} parent=1 // pred_region
      %36 = dma.done [#allocation3], 256
    $region29: #{forward.1} parent=1 // pred_fallthru
      _
    %v38 = vld [vmem:[#allocation2] sm:$0xff]
    %v39 = vld [vmem:[#allocation2 + $0x8] sm:$0xff]
    %v40 = vpack.c.bf16 %v39, %v38
    %v41 = vld [vmem:[%s1] sm:$0xf]
    %v42 = vld [vmem:[%s1 + $0x4] sm:$0xf]
    %v43 = vld [vmem:[%s3] sm:$0x1]
    %v45 = vlaneseq
    %v46 = vshrl.u32 %v45, 7
    %v47 = vsub.s32 0, %v46
    %v48 = vrot.slane %v43, %v47
    %v52 = vunpack.c.l.b16 %v41
    %v53 = vunpack.c.l.b16 %v42
    %v54 = vpack.c.b16 %v53, %v52
    %vm56 = vcmask 130048
    %v58 = vsel %vm56, %v40, 0
    %60 = vmatprep.subr.bf16.mxu0 0
    %61 = vmatpush1.bf16.msra.mxu0 %v54
    %62 = vmatprep.subr.bf16.mxu0 0
    %63 = vmatpush1.bf16.msra.mxu0 0
    %64 = vmatprep.subr.bf16.mxu0 0
    %65 = vmatpush1.bf16.msra.mxu0 0
    %66 = vmatprep.subr.bf16.mxu0 0
    %67 = vmatpush1.bf16.msra.mxu0 0
    %68 = vmatprep.subr.bf16.mxu0 0
    %69 = vmatpush1.bf16.msra.mxu0 0
    %70 = vmatprep.subr.bf16.mxu0 0
    %71 = vmatpush1.bf16.msra.mxu0 0
    %72 = vmatprep.subr.bf16.mxu0 0
    %73 = vmatpush1.bf16.msra.mxu0 0
    %74 = vmatprep.subr.bf16.mxu0 0
    %75 = vmatpush1.bf16.msra.mxu0 0
    %76 = vmatprep.subr.bf16.mxu0 0
    %77 = vmatpush1.bf16.msra.mxu0 0
    %78 = vmatprep.subr.bf16.mxu0 0
    %79 = vmatpush1.bf16.msra.mxu0 0
    %80 = vmatprep.subr.bf16.mxu0 0
    %81 = vmatpush1.bf16.msra.mxu0 0
    %82 = vmatprep.subr.bf16.mxu0 0
    %83 = vmatpush1.bf16.msra.mxu0 0
    %84 = vmatprep.subr.bf16.mxu0 0
    %85 = vmatpush1.bf16.msra.mxu0 0
    %86 = vmatprep.subr.bf16.mxu0 0
    %87 = vmatpush1.bf16.msra.mxu0 0
    %88 = vmatprep.subr.bf16.mxu0 0
    %89 = vmatpush1.bf16.msra.mxu0 0
    %90 = vmatprep.subr.bf16.mxu0 0
    %91 = vmatpush1.bf16.msra.mxu0 0
    %92 = vmatprep.mubr.bf16.mxu0 0
    %93 = vmatmul.mubr.bf16.gmra.mrb[0].mxu0 %v58
    %v94 = vpop.f32.mrb[0].mxu0
    %v95 = vadd.f32 %v48, %v94
    %v96 = vpop.f32.mrb[0].mxu0
    %v97 = vpop.f32.mrb[0].mxu0
    %v98 = vadd.f32 %v48, %v97
    %v99 = vpop.f32.mrb[0].mxu0
    %100 = vdwg.mxu0
    %v101 = vld [vmem:[%s2] sm:$0xf]
    %v102 = vld [vmem:[%s2 + $0x4] sm:$0xf]
    %v103 = vld [vmem:[%s2 + $0x8] sm:$0xf]
    %v104 = vld [vmem:[%s2 + $0xc] sm:$0xf]
    %v105 = vld [vmem:[%s4] sm:$0x1]
    %v106 = vld [vmem:[%s5] sm:$0x1]
    %v111 = vunpack.c.l.b16 %v101
    %v112 = vunpack.c.l.b16 %v102
    %v113 = vunpack.c.l.b16 %v103
    %v114 = vunpack.c.l.b16 %v104
    %v115 = vpack.c.b16 %v112, %v111
    %v116 = vpack.c.b16 %v114, %v113
    %vm119 = vcmask 261120
    %v121 = vsel %vm119, 0, 0
    %123 = vmatprep.subr.bf16.mxu0 0
    %124 = vmatpush1.bf16.msra.mxu0 %v115
    %125 = vmatprep.subr.bf16.mxu0 0
    %126 = vmatpush1.bf16.msra.mxu0 %v116
    %127 = vmatprep.subr.bf16.mxu0 0
    %128 = vmatpush1.bf16.msra.mxu0 0
    %129 = vmatprep.subr.bf16.mxu0 0
    %130 = vmatpush1.bf16.msra.mxu0 0
    %131 = vmatprep.subr.bf16.mxu0 0
    %132 = vmatpush1.bf16.msra.mxu0 0
    %133 = vmatprep.subr.bf16.mxu0 0
    %134 = vmatpush1.bf16.msra.mxu0 0
    %135 = vmatprep.subr.bf16.mxu0 0
    %136 = vmatpush1.bf16.msra.mxu0 0
    %137 = vmatprep.subr.bf16.mxu0 0
    %138 = vmatpush1.bf16.msra.mxu0 0
    %139 = vmatprep.subr.bf16.mxu0 0
    %140 = vmatpush1.bf16.msra.mxu0 0
    %141 = vmatprep.subr.bf16.mxu0 0
    %142 = vmatpush1.bf16.msra.mxu0 0
    %143 = vmatprep.subr.bf16.mxu0 0
    %144 = vmatpush1.bf16.msra.mxu0 0
    %145 = vmatprep.subr.bf16.mxu0 0
    %146 = vmatpush1.bf16.msra.mxu0 0
    %147 = vmatprep.subr.bf16.mxu0 0
    %148 = vmatpush1.bf16.msra.mxu0 0
    %149 = vmatprep.subr.bf16.mxu0 0
    %150 = vmatpush1.bf16.msra.mxu0 0
    %151 = vmatprep.subr.bf16.mxu0 0
    %152 = vmatpush1.bf16.msra.mxu0 0
    %153 = vmatprep.subr.bf16.mxu0 0
    %154 = vmatpush1.bf16.msra.mxu0 0
    %155 = vmatprep.mubr.bf16.mxu0 0
    %156 = vmatmul.mubr.bf16.gmra.mrb[0].mxu0 %v121
    %v157 = vpop.f32.mrb[0].mxu0
    %v158 = vadd.f32 0.0, %v157
    %v159 = vpop.f32.mrb[0].mxu0
    %v160 = vpop.f32.mrb[0].mxu0
    %v161 = vpop.f32.mrb[0].mxu0
    %162 = vdwg.mxu0
    %v164 = vrot.slane %v158, 1
    %v167 = vadd.f32 %v95, %v158
    %v168 = vadd.f32 %v98, %v164
    %v169 = vtanh.pop %v167
    %v170 = vtanh.pop %v168
    %v172 = vlaneseq
    %v173 = vshrl.u32 %v172, 7
    %v174 = vsub.s32 0, %v173
    %v175 = vrot.slane %v105, %v174
    %v177 = vmul.f32 %v169, %v175
    %v178 = vmul.f32 %v170, %v175
    %v180 = vlaneseq
    %v181 = vshrl.u32 %v180, 7
    %v182 = vsub.s32 0, %v181
    %v183 = vrot.slane %v106, %v182
    %v185 = vadd.f32 %v177, %v183
    %v186 = vadd.f32 %v178, %v183
    %v187 = vmul.f32 %v185, 0.0
    %v188 = vmul.f32 %v186, 0.0
    %191 = vrot.lane.b32.xlu0 %v185, 64
    %v192 = vpop.permute.xlu0 %191
    %193 = vrot.lane.b32.xlu0 %v186, 64
    %v194 = vpop.permute.xlu0 %193
    %v197 = vmul.f32 %v185, %v192
    %v198 = vmul.f32 %v186, %v194
    %201 = vrot.lane.b32.xlu0 %v197, 32
    %v202 = vpop.permute.xlu0 %201
    %203 = vrot.lane.b32.xlu0 %v198, 32
    %v204 = vpop.permute.xlu0 %203
    %v207 = vadd.f32 %v187, %v202
    %v208 = vadd.f32 %v188, %v204
    %v209 = vtanh.pop %v207
    %v210 = vtanh.pop %v208
    %213 = vrot.lane.b32.xlu0 %v209, 64
    %v214 = vpop.permute.xlu0 %213
    %215 = vrot.lane.b32.xlu0 %v210, 64
    %v216 = vpop.permute.xlu0 %215
    %v219 = vmul.f32 %v185, %v214
    %v220 = vmul.f32 %v186, %v216
    %v221 = vpack.c.bf16 %v219, %v219
    %v222 = vpack.c.bf16 %v220, %v220
    %v225 = vunpack.c.l.b16 %v221
    %v226 = vunpack.c.l.b16 %v222
    %v227 = vrot.slane %v226, 7
    %vm228 = vcmask 1041409
    %v229 = vsel %vm228, %v227, %v225
    %v230 = vpack.c.b16 %v229, %v229
    %231 = vrot.lane.b32.xlu0 %v230, 32
    %v232 = vpop.permute.xlu0 %231
    %v234 = vsel %vm119, %v232, 0
    %236 = vmatprep.subr.bf16.mxu0 0
    %237 = vmatpush1.bf16.msra.mxu0 %v115
    %238 = vmatprep.subr.bf16.mxu0 0
    %239 = vmatpush1.bf16.msra.mxu0 %v116
    %240 = vmatprep.subr.bf16.mxu0 0
    %241 = vmatpush1.bf16.msra.mxu0 0
    %242 = vmatprep.subr.bf16.mxu0 0
    %243 = vmatpush1.bf16.msra.mxu0 0
    %244 = vmatprep.subr.bf16.mxu0 0
    %245 = vmatpush1.bf16.msra.mxu0 0
    %246 = vmatprep.subr.bf16.mxu0 0
    %247 = vmatpush1.bf16.msra.mxu0 0
    %248 = vmatprep.subr.bf16.mxu0 0
    %249 = vmatpush1.bf16.msra.mxu0 0
    %250 = vmatprep.subr.bf16.mxu0 0
    %251 = vmatpush1.bf16.msra.mxu0 0
    %252 = vmatprep.subr.bf16.mxu0 0
    %253 = vmatpush1.bf16.msra.mxu0 0
    %254 = vmatprep.subr.bf16.mxu0 0
    %255 = vmatpush1.bf16.msra.mxu0 0
    %256 = vmatprep.subr.bf16.mxu0 0
    %257 = vmatpush1.bf16.msra.mxu0 0
    %258 = vmatprep.subr.bf16.mxu0 0
    %259 = vmatpush1.bf16.msra.mxu0 0
    %260 = vmatprep.subr.bf16.mxu0 0
    %261 = vmatpush1.bf16.msra.mxu0 0
    %262 = vmatprep.subr.bf16.mxu0 0
    %263 = vmatpush1.bf16.msra.mxu0 0
    %264 = vmatprep.subr.bf16.mxu0 0
    %265 = vmatpush1.bf16.msra.mxu0 0
    %266 = vmatprep.subr.bf16.mxu0 0
    %267 = vmatpush1.bf16.msra.mxu0 0
    %268 = vmatprep.mubr.bf16.mxu0 0
    %269 = vmatmul.mubr.bf16.gmra.mrb[0].mxu0 %v234
    %v270 = vpop.f32.mrb[0].mxu0
    %v271 = vadd.f32 0.0, %v270
    %v272 = vpop.f32.mrb[0].mxu0
    %v273 = vpop.f32.mrb[0].mxu0
    %v274 = vpop.f32.mrb[0].mxu0
    %275 = vdwg.mxu0
    %v277 = vrot.slane %v271, 7
    %v280 = vadd.f32 %v95, %v277
    %v281 = vadd.f32 %v98, %v271
    %v282 = vtanh.pop %v280
    %v283 = vtanh.pop %v281
    %v284 = vmul.f32 %v282, %v175
    %v285 = vmul.f32 %v283, %v175
    %v286 = vadd.f32 %v284, %v183
    %v287 = vadd.f32 %v285, %v183
    %v290 = vrot.slane %v207, 7
    %v291 = vrot.slane %v208, 7
    %v294 = vmul.f32 %v286, %v290
    %v295 = vmul.f32 %v287, %v291
    %298 = vrot.lane.b32.xlu0 %v286, 64
    %v299 = vpop.permute.xlu0 %298
    %300 = vrot.lane.b32.xlu0 %v287, 64
    %v301 = vpop.permute.xlu0 %300
    %v304 = vmul.f32 %v286, %v299
    %v305 = vmul.f32 %v287, %v301
    %308 = vrot.lane.b32.xlu0 %v304, 32
    %v309 = vpop.permute.xlu0 %308
    %310 = vrot.lane.b32.xlu0 %v305, 32
    %v311 = vpop.permute.xlu0 %310
    %v314 = vadd.f32 %v294, %v309
    %v315 = vadd.f32 %v295, %v311
    %v316 = vtanh.pop %v314
    %v317 = vtanh.pop %v315
    %320 = vrot.lane.b32.xlu0 %v316, 64
    %v321 = vpop.permute.xlu0 %320
    %322 = vrot.lane.b32.xlu0 %v317, 64
    %v323 = vpop.permute.xlu0 %322
    %v326 = vmul.f32 %v286, %v321
    %v327 = vmul.f32 %v287, %v323
    %v328 = vpack.c.bf16 %v326, %v326
    %v329 = vpack.c.bf16 %v327, %v327
    %v332 = vunpack.c.l.b16 %v328
    %v333 = vunpack.c.l.b16 %v329
    %v334 = vrot.slane %v332, 1
    %v335 = vsel %vm228, %v333, %v334
    %v336 = vpack.c.b16 %v335, %v335
    %337 = vrot.lane.b32.xlu0 %v336, 32
    %v338 = vpop.permute.xlu0 %337
    %v340 = vsel %vm119, %v338, 0
    %342 = vmatprep.subr.bf16.mxu0 0
    %343 = vmatpush1.bf16.msra.mxu0 %v115
    %344 = vmatprep.subr.bf16.mxu0 0
    %345 = vmatpush1.bf16.msra.mxu0 %v116
    %346 = vmatprep.subr.bf16.mxu0 0
    %347 = vmatpush1.bf16.msra.mxu0 0
    %348 = vmatprep.subr.bf16.mxu0 0
    %349 = vmatpush1.bf16.msra.mxu0 0
    %350 = vmatprep.subr.bf16.mxu0 0
    %351 = vmatpush1.bf16.msra.mxu0 0
    %352 = vmatprep.subr.bf16.mxu0 0
    %353 = vmatpush1.bf16.msra.mxu0 0
    %354 = vmatprep.subr.bf16.mxu0 0
    %355 = vmatpush1.bf16.msra.mxu0 0
    %356 = vmatprep.subr.bf16.mxu0 0
    %357 = vmatpush1.bf16.msra.mxu0 0
    %358 = vmatprep.subr.bf16.mxu0 0
    %359 = vmatpush1.bf16.msra.mxu0 0
    %360 = vmatprep.subr.bf16.mxu0 0
    %361 = vmatpush1.bf16.msra.mxu0 0
    %362 = vmatprep.subr.bf16.mxu0 0
    %363 = vmatpush1.bf16.msra.mxu0 0
    %364 = vmatprep.subr.bf16.mxu0 0
    %365 = vmatpush1.bf16.msra.mxu0 0
    %366 = vmatprep.subr.bf16.mxu0 0
    %367 = vmatpush1.bf16.msra.mxu0 0
    %368 = vmatprep.subr.bf16.mxu0 0
    %369 = vmatpush1.bf16.msra.mxu0 0
    %370 = vmatprep.subr.bf16.mxu0 0
    %371 = vmatpush1.bf16.msra.mxu0 0
    %372 = vmatprep.subr.bf16.mxu0 0
    %373 = vmatpush1.bf16.msra.mxu0 0
    %374 = vmatprep.mubr.bf16.mxu0 0
    %375 = vmatmul.mubr.bf16.gmra.mrb[0].mxu0 %v340
    %v376 = vpop.f32.mrb[0].mxu0
    %v377 = vadd.f32 0.0, %v376
    %v378 = vpop.f32.mrb[0].mxu0
    %v379 = vpop.f32.mrb[0].mxu0
    %v380 = vpop.f32.mrb[0].mxu0
    %381 = vdwg.mxu0
    %v383 = vrot.slane %v377, 6
    %v384 = vrot.slane %v377, 7
    %v387 = vadd.f32 %v95, %v383
    %v388 = vadd.f32 %v98, %v384
    %v389 = vtanh.pop %v387
    %v390 = vtanh.pop %v388
    %v391 = vmul.f32 %v389, %v175
    %v392 = vmul.f32 %v390, %v175
    %v393 = vadd.f32 %v391, %v183
    %v394 = vadd.f32 %v392, %v183
    %v397 = vrot.slane %v314, 7
    %v398 = vrot.slane %v315, 7
    %v401 = vmul.f32 %v393, %v397
    %v402 = vmul.f32 %v394, %v398
    %405 = vrot.lane.b32.xlu0 %v393, 64
    %v406 = vpop.permute.xlu0 %405
    %407 = vrot.lane.b32.xlu0 %v394, 64
    %v408 = vpop.permute.xlu0 %407
    %v411 = vmul.f32 %v393, %v406
    %v412 = vmul.f32 %v394, %v408
    %415 = vrot.lane.b32.xlu0 %v411, 32
    %v416 = vpop.permute.xlu0 %415
    %417 = vrot.lane.b32.xlu0 %v412, 32
    %v418 = vpop.permute.xlu0 %417
    %v421 = vadd.f32 %v401, %v416
    %v422 = vadd.f32 %v402, %v418
    %v423 = vtanh.pop %v421
    %v424 = vtanh.pop %v422
    %427 = vrot.lane.b32.xlu0 %v423, 64
    %v428 = vpop.permute.xlu0 %427
    %429 = vrot.lane.b32.xlu0 %v424, 64
    %v430 = vpop.permute.xlu0 %429
    %v433 = vmul.f32 %v393, %v428
    %v434 = vmul.f32 %v394, %v430
    %v435 = vpack.c.bf16 %v433, %v433
    %v436 = vpack.c.bf16 %v434, %v434
    %v439 = vunpack.c.l.b16 %v435
    %v440 = vunpack.c.l.b16 %v436
    %v441 = vrot.slane %v439, 2
    %v442 = vrot.slane %v440, 1
    %v443 = vsel %vm228, %v442, %v441
    %v444 = vpack.c.b16 %v443, %v443
    %445 = vrot.lane.b32.xlu0 %v444, 32
    %v446 = vpop.permute.xlu0 %445
    %v448 = vsel %vm119, %v446, 0
    %450 = vmatprep.subr.bf16.mxu0 0
    %451 = vmatpush1.bf16.msra.mxu0 %v115
    %452 = vmatprep.subr.bf16.mxu0 0
    %453 = vmatpush1.bf16.msra.mxu0 %v116
    %454 = vmatprep.subr.bf16.mxu0 0
    %455 = vmatpush1.bf16.msra.mxu0 0
    %456 = vmatprep.subr.bf16.mxu0 0
    %457 = vmatpush1.bf16.msra.mxu0 0
    %458 = vmatprep.subr.bf16.mxu0 0
    %459 = vmatpush1.bf16.msra.mxu0 0
    %460 = vmatprep.subr.bf16.mxu0 0
    %461 = vmatpush1.bf16.msra.mxu0 0
    %462 = vmatprep.subr.bf16.mxu0 0
    %463 = vmatpush1.bf16.msra.mxu0 0
    %464 = vmatprep.subr.bf16.mxu0 0
    %465 = vmatpush1.bf16.msra.mxu0 0
    %466 = vmatprep.subr.bf16.mxu0 0
    %467 = vmatpush1.bf16.msra.mxu0 0
    %468 = vmatprep.subr.bf16.mxu0 0
    %469 = vmatpush1.bf16.msra.mxu0 0
    %470 = vmatprep.subr.bf16.mxu0 0
    %471 = vmatpush1.bf16.msra.mxu0 0
    %472 = vmatprep.subr.bf16.mxu0 0
    %473 = vmatpush1.bf16.msra.mxu0 0
    %474 = vmatprep.subr.bf16.mxu0 0
    %475 = vmatpush1.bf16.msra.mxu0 0
    %476 = vmatprep.subr.bf16.mxu0 0
    %477 = vmatpush1.bf16.msra.mxu0 0
    %478 = vmatprep.subr.bf16.mxu0 0
    %479 = vmatpush1.bf16.msra.mxu0 0
    %480 = vmatprep.subr.bf16.mxu0 0
    %481 = vmatpush1.bf16.msra.mxu0 0
    %482 = vmatprep.mubr.bf16.mxu0 0
    %483 = vmatmul.mubr.bf16.gmra.mrb[0].mxu0 %v448
    %v484 = vpop.f32.mrb[0].mxu0
    %v485 = vadd.f32 0.0, %v484
    %v486 = vpop.f32.mrb[0].mxu0
    %v487 = vpop.f32.mrb[0].mxu0
    %v488 = vpop.f32.mrb[0].mxu0
    %489 = vdwg.mxu0
    %v491 = vrot.slane %v485, 5
    %v492 = vrot.slane %v485, 6
    %v495 = vadd.f32 %v95, %v491
    %v496 = vadd.f32 %v98, %v492
    %v497 = vtanh.pop %v495
    %v498 = vtanh.pop %v496
    %v499 = vmul.f32 %v497, %v175
    %v500 = vmul.f32 %v498, %v175
    %v501 = vadd.f32 %v499, %v183
    %v502 = vadd.f32 %v500, %v183
    %v505 = vrot.slane %v421, 7
    %v506 = vrot.slane %v422, 7
    %v509 = vmul.f32 %v501, %v505
    %v510 = vmul.f32 %v502, %v506
    %513 = vrot.lane.b32.xlu0 %v501, 64
    %v514 = vpop.permute.xlu0 %513
    %515 = vrot.lane.b32.xlu0 %v502, 64
    %v516 = vpop.permute.xlu0 %515
    %v519 = vmul.f32 %v501, %v514
    %v520 = vmul.f32 %v502, %v516
    %523 = vrot.lane.b32.xlu0 %v519, 32
    %v524 = vpop.permute.xlu0 %523
    %525 = vrot.lane.b32.xlu0 %v520, 32
    %v526 = vpop.permute.xlu0 %525
    %v529 = vadd.f32 %v509, %v524
    %v530 = vadd.f32 %v510, %v526
    %v531 = vtanh.pop %v529
    %v532 = vtanh.pop %v530
    %535 = vrot.lane.b32.xlu0 %v531, 64
    %v536 = vpop.permute.xlu0 %535
    %537 = vrot.lane.b32.xlu0 %v532, 64
    %v538 = vpop.permute.xlu0 %537
    %v541 = vmul.f32 %v501, %v536
    %v542 = vmul.f32 %v502, %v538
    %v543 = vpack.c.bf16 %v541, %v541
    %v544 = vpack.c.bf16 %v542, %v542
    %v547 = vunpack.c.l.b16 %v543
    %v548 = vunpack.c.l.b16 %v544
    %v549 = vrot.slane %v547, 3
    %v550 = vrot.slane %v548, 2
    %v551 = vsel %vm228, %v550, %v549
    %v552 = vpack.c.b16 %v551, %v551
    %553 = vrot.lane.b32.xlu0 %v552, 32
    %v554 = vpop.permute.xlu0 %553
    %v556 = vsel %vm119, %v554, 0
    %558 = vmatprep.subr.bf16.mxu0 0
    %559 = vmatpush1.bf16.msra.mxu0 %v115
    %560 = vmatprep.subr.bf16.mxu0 0
    %561 = vmatpush1.bf16.msra.mxu0 %v116
    %562 = vmatprep.subr.bf16.mxu0 0
    %563 = vmatpush1.bf16.msra.mxu0 0
    %564 = vmatprep.subr.bf16.mxu0 0
    %565 = vmatpush1.bf16.msra.mxu0 0
    %566 = vmatprep.subr.bf16.mxu0 0
    %567 = vmatpush1.bf16.msra.mxu0 0
    %568 = vmatprep.subr.bf16.mxu0 0
    %569 = vmatpush1.bf16.msra.mxu0 0
    %570 = vmatprep.subr.bf16.mxu0 0
    %571 = vmatpush1.bf16.msra.mxu0 0
    %572 = vmatprep.subr.bf16.mxu0 0
    %573 = vmatpush1.bf16.msra.mxu0 0
    %574 = vmatprep.subr.bf16.mxu0 0
    %575 = vmatpush1.bf16.msra.mxu0 0
    %576 = vmatprep.subr.bf16.mxu0 0
    %577 = vmatpush1.bf16.msra.mxu0 0
    %578 = vmatprep.subr.bf16.mxu0 0
    %579 = vmatpush1.bf16.msra.mxu0 0
    %580 = vmatprep.subr.bf16.mxu0 0
    %581 = vmatpush1.bf16.msra.mxu0 0
    %582 = vmatprep.subr.bf16.mxu0 0
    %583 = vmatpush1.bf16.msra.mxu0 0
    %584 = vmatprep.subr.bf16.mxu0 0
    %585 = vmatpush1.bf16.msra.mxu0 0
    %586 = vmatprep.subr.bf16.mxu0 0
    %587 = vmatpush1.bf16.msra.mxu0 0
    %588 = vmatprep.subr.bf16.mxu0 0
    %589 = vmatpush1.bf16.msra.mxu0 0
    %590 = vmatprep.mubr.bf16.mxu0 0
    %591 = vmatmul.mubr.bf16.gmra.mrb[0].mxu0 %v556
    %v592 = vpop.f32.mrb[0].mxu0
    %v593 = vadd.f32 0.0, %v592
    %v594 = vpop.f32.mrb[0].mxu0
    %v595 = vpop.f32.mrb[0].mxu0
    %v596 = vpop.f32.mrb[0].mxu0
    %597 = vdwg.mxu0
    %v599 = vrot.slane %v593, 4
    %v600 = vrot.slane %v593, 5
    %v603 = vadd.f32 %v95, %v599
    %v604 = vadd.f32 %v98, %v600
    %v605 = vtanh.pop %v603
    %v606 = vtanh.pop %v604
    %v607 = vmul.f32 %v605, %v175
    %v608 = vmul.f32 %v606, %v175
    %v609 = vadd.f32 %v607, %v183
    %v610 = vadd.f32 %v608, %v183
    %v613 = vrot.slane %v529, 7
    %v614 = vrot.slane %v530, 7
    %v617 = vmul.f32 %v609, %v613
    %v618 = vmul.f32 %v610, %v614
    %621 = vrot.lane.b32.xlu0 %v609, 64
    %v622 = vpop.permute.xlu0 %621
    %623 = vrot.lane.b32.xlu0 %v610, 64
    %v624 = vpop.permute.xlu0 %623
    %v627 = vmul.f32 %v609, %v622
    %v628 = vmul.f32 %v610, %v624
    %631 = vrot.lane.b32.xlu0 %v627, 32
    %v632 = vpop.permute.xlu0 %631
    %633 = vrot.lane.b32.xlu0 %v628, 32
    %v634 = vpop.permute.xlu0 %633
    %v637 = vadd.f32 %v617, %v632
    %v638 = vadd.f32 %v618, %v634
    %v639 = vtanh.pop %v637
    %v640 = vtanh.pop %v638
    %643 = vrot.lane.b32.xlu0 %v639, 64
    %v644 = vpop.permute.xlu0 %643
    %645 = vrot.lane.b32.xlu0 %v640, 64
    %v646 = vpop.permute.xlu0 %645
    %v649 = vmul.f32 %v609, %v644
    %v650 = vmul.f32 %v610, %v646
    %v651 = vpack.c.bf16 %v649, %v649
    %v652 = vpack.c.bf16 %v650, %v650
    %v655 = vunpack.c.l.b16 %v651
    %v656 = vunpack.c.l.b16 %v652
    %v657 = vrot.slane %v655, 4
    %v658 = vrot.slane %v656, 3
    %v659 = vsel %vm228, %v658, %v657
    %v660 = vpack.c.b16 %v659, %v659
    %661 = vrot.lane.b32.xlu0 %v660, 32
    %v662 = vpop.permute.xlu0 %661
    %v664 = vsel %vm119, %v662, 0
    %666 = vmatprep.subr.bf16.mxu0 0
    %667 = vmatpush1.bf16.msra.mxu0 %v115
    %668 = vmatprep.subr.bf16.mxu0 0
    %669 = vmatpush1.bf16.msra.mxu0 %v116
    %670 = vmatprep.subr.bf16.mxu0 0
    %671 = vmatpush1.bf16.msra.mxu0 0
    %672 = vmatprep.subr.bf16.mxu0 0
    %673 = vmatpush1.bf16.msra.mxu0 0
    %674 = vmatprep.subr.bf16.mxu0 0
    %675 = vmatpush1.bf16.msra.mxu0 0
    %676 = vmatprep.subr.bf16.mxu0 0
    %677 = vmatpush1.bf16.msra.mxu0 0
    %678 = vmatprep.subr.bf16.mxu0 0
    %679 = vmatpush1.bf16.msra.mxu0 0
    %680 = vmatprep.subr.bf16.mxu0 0
    %681 = vmatpush1.bf16.msra.mxu0 0
    %682 = vmatprep.subr.bf16.mxu0 0
    %683 = vmatpush1.bf16.msra.mxu0 0
    %684 = vmatprep.subr.bf16.mxu0 0
    %685 = vmatpush1.bf16.msra.mxu0 0
    %686 = vmatprep.subr.bf16.mxu0 0
    %687 = vmatpush1.bf16.msra.mxu0 0
    %688 = vmatprep.subr.bf16.mxu0 0
    %689 = vmatpush1.bf16.msra.mxu0 0
    %690 = vmatprep.subr.bf16.mxu0 0
    %691 = vmatpush1.bf16.msra.mxu0 0
    %692 = vmatprep.subr.bf16.mxu0 0
    %693 = vmatpush1.bf16.msra.mxu0 0
    %694 = vmatprep.subr.bf16.mxu0 0
    %695 = vmatpush1.bf16.msra.mxu0 0
    %696 = vmatprep.subr.bf16.mxu0 0
    %697 = vmatpush1.bf16.msra.mxu0 0
    %698 = vmatprep.mubr.bf16.mxu0 0
    %699 = vmatmul.mubr.bf16.gmra.mrb[0].mxu0 %v664
    %v700 = vpop.f32.mrb[0].mxu0
    %v701 = vadd.f32 0.0, %v700
    %v702 = vpop.f32.mrb[0].mxu0
    %v703 = vpop.f32.mrb[0].mxu0
    %v704 = vpop.f32.mrb[0].mxu0
    %705 = vdwg.mxu0
    %v707 = vrot.slane %v701, 3
    %v708 = vrot.slane %v701, 4
    %v711 = vadd.f32 %v95, %v707
    %v712 = vadd.f32 %v98, %v708
    %v713 = vtanh.pop %v711
    %v714 = vtanh.pop %v712
    %v715 = vmul.f32 %v713, %v175
    %v716 = vmul.f32 %v714, %v175
    %v717 = vadd.f32 %v715, %v183
    %v718 = vadd.f32 %v716, %v183
    %v721 = vrot.slane %v637, 7
    %v722 = vrot.slane %v638, 7
    %v725 = vmul.f32 %v717, %v721
    %v726 = vmul.f32 %v718, %v722
    %729 = vrot.lane.b32.xlu0 %v717, 64
    %v730 = vpop.permute.xlu0 %729
    %731 = vrot.lane.b32.xlu0 %v718, 64
    %v732 = vpop.permute.xlu0 %731
    %v735 = vmul.f32 %v717, %v730
    %v736 = vmul.f32 %v718, %v732
    %739 = vrot.lane.b32.xlu0 %v735, 32
    %v740 = vpop.permute.xlu0 %739
    %741 = vrot.lane.b32.xlu0 %v736, 32
    %v742 = vpop.permute.xlu0 %741
    %v745 = vadd.f32 %v725, %v740
    %v746 = vadd.f32 %v726, %v742
    %v747 = vtanh.pop %v745
    %v748 = vtanh.pop %v746
    %751 = vrot.lane.b32.xlu0 %v747, 64
    %v752 = vpop.permute.xlu0 %751
    %753 = vrot.lane.b32.xlu0 %v748, 64
    %v754 = vpop.permute.xlu0 %753
    %v757 = vmul.f32 %v717, %v752
    %v758 = vmul.f32 %v718, %v754
    %v759 = vpack.c.bf16 %v757, %v757
    %v760 = vpack.c.bf16 %v758, %v758
    %v763 = vunpack.c.l.b16 %v759
    %v764 = vunpack.c.l.b16 %v760
    %v765 = vrot.slane %v763, 5
    %v766 = vrot.slane %v764, 4
    %v767 = vsel %vm228, %v766, %v765
    %v768 = vpack.c.b16 %v767, %v767
    %769 = vrot.lane.b32.xlu0 %v768, 32
    %v770 = vpop.permute.xlu0 %769
    %v772 = vsel %vm119, %v770, 0
    %774 = vmatprep.subr.bf16.mxu0 0
    %775 = vmatpush1.bf16.msra.mxu0 %v115
    %776 = vmatprep.subr.bf16.mxu0 0
    %777 = vmatpush1.bf16.msra.mxu0 %v116
    %778 = vmatprep.subr.bf16.mxu0 0
    %779 = vmatpush1.bf16.msra.mxu0 0
    %780 = vmatprep.subr.bf16.mxu0 0
    %781 = vmatpush1.bf16.msra.mxu0 0
    %782 = vmatprep.subr.bf16.mxu0 0
    %783 = vmatpush1.bf16.msra.mxu0 0
    %784 = vmatprep.subr.bf16.mxu0 0
    %785 = vmatpush1.bf16.msra.mxu0 0
    %786 = vmatprep.subr.bf16.mxu0 0
    %787 = vmatpush1.bf16.msra.mxu0 0
    %788 = vmatprep.subr.bf16.mxu0 0
    %789 = vmatpush1.bf16.msra.mxu0 0
    %790 = vmatprep.subr.bf16.mxu0 0
    %791 = vmatpush1.bf16.msra.mxu0 0
    %792 = vmatprep.subr.bf16.mxu0 0
    %793 = vmatpush1.bf16.msra.mxu0 0
    %794 = vmatprep.subr.bf16.mxu0 0
    %795 = vmatpush1.bf16.msra.mxu0 0
    %796 = vmatprep.subr.bf16.mxu0 0
    %797 = vmatpush1.bf16.msra.mxu0 0
    %798 = vmatprep.subr.bf16.mxu0 0
    %799 = vmatpush1.bf16.msra.mxu0 0
    %800 = vmatprep.subr.bf16.mxu0 0
    %801 = vmatpush1.bf16.msra.mxu0 0
    %802 = vmatprep.subr.bf16.mxu0 0
    %803 = vmatpush1.bf16.msra.mxu0 0
    %804 = vmatprep.subr.bf16.mxu0 0
    %805 = vmatpush1.bf16.msra.mxu0 0
    %806 = vmatprep.mubr.bf16.mxu0 0
    %807 = vmatmul.mubr.bf16.gmra.mrb[0].mxu0 %v772
    %v808 = vpop.f32.mrb[0].mxu0
    %v809 = vadd.f32 0.0, %v808
    %v810 = vpop.f32.mrb[0].mxu0
    %v811 = vpop.f32.mrb[0].mxu0
    %v812 = vpop.f32.mrb[0].mxu0
    %813 = vdwg.mxu0
    %v815 = vrot.slane %v809, 2
    %v816 = vrot.slane %v809, 3
    %v819 = vadd.f32 %v95, %v815
    %v820 = vadd.f32 %v98, %v816
    %v821 = vtanh.pop %v819
    %v822 = vtanh.pop %v820
    %v823 = vmul.f32 %v821, %v175
    %v824 = vmul.f32 %v822, %v175
    %v825 = vadd.f32 %v823, %v183
    %v826 = vadd.f32 %v824, %v183
    %v829 = vrot.slane %v745, 7
    %v830 = vrot.slane %v746, 7
    %v833 = vmul.f32 %v825, %v829
    %v834 = vmul.f32 %v826, %v830
    %837 = vrot.lane.b32.xlu0 %v825, 64
    %v838 = vpop.permute.xlu0 %837
    %839 = vrot.lane.b32.xlu0 %v826, 64
    %v840 = vpop.permute.xlu0 %839
    %v843 = vmul.f32 %v825, %v838
    %v844 = vmul.f32 %v826, %v840
    %847 = vrot.lane.b32.xlu0 %v843, 32
    %v848 = vpop.permute.xlu0 %847
    %849 = vrot.lane.b32.xlu0 %v844, 32
    %v850 = vpop.permute.xlu0 %849
    %v853 = vadd.f32 %v833, %v848
    %v854 = vadd.f32 %v834, %v850
    %v855 = vtanh.pop %v853
    %v856 = vtanh.pop %v854
    %859 = vrot.lane.b32.xlu0 %v855, 64
    %v860 = vpop.permute.xlu0 %859
    %861 = vrot.lane.b32.xlu0 %v856, 64
    %v862 = vpop.permute.xlu0 %861
    %v865 = vmul.f32 %v825, %v860
    %v866 = vmul.f32 %v826, %v862
    %v867 = vpack.c.bf16 %v865, %v865
    %v868 = vpack.c.bf16 %v866, %v866
    %v871 = vunpack.c.l.b16 %v867
    %v872 = vunpack.c.l.b16 %v868
    %v873 = vrot.slane %v871, 6
    %v874 = vrot.slane %v872, 5
    %v875 = vsel %vm228, %v874, %v873
    %v876 = vpack.c.b16 %v875, %v875
    %877 = vrot.lane.b32.xlu0 %v876, 32
    %v878 = vpop.permute.xlu0 %877
    %v880 = vsel %vm119, %v878, 0
    %882 = vmatprep.subr.bf16.mxu0 0
    %883 = vmatpush1.bf16.msra.mxu0 %v115
    %884 = vmatprep.subr.bf16.mxu0 0
    %885 = vmatpush1.bf16.msra.mxu0 %v116
    %886 = vmatprep.subr.bf16.mxu0 0
    %887 = vmatpush1.bf16.msra.mxu0 0
    %888 = vmatprep.subr.bf16.mxu0 0
    %889 = vmatpush1.bf16.msra.mxu0 0
    %890 = vmatprep.subr.bf16.mxu0 0
    %891 = vmatpush1.bf16.msra.mxu0 0
    %892 = vmatprep.subr.bf16.mxu0 0
    %893 = vmatpush1.bf16.msra.mxu0 0
    %894 = vmatprep.subr.bf16.mxu0 0
    %895 = vmatpush1.bf16.msra.mxu0 0
    %896 = vmatprep.subr.bf16.mxu0 0
    %897 = vmatpush1.bf16.msra.mxu0 0
    %898 = vmatprep.subr.bf16.mxu0 0
    %899 = vmatpush1.bf16.msra.mxu0 0
    %900 = vmatprep.subr.bf16.mxu0 0
    %901 = vmatpush1.bf16.msra.mxu0 0
    %902 = vmatprep.subr.bf16.mxu0 0
    %903 = vmatpush1.bf16.msra.mxu0 0
    %904 = vmatprep.subr.bf16.mxu0 0
    %905 = vmatpush1.bf16.msra.mxu0 0
    %906 = vmatprep.subr.bf16.mxu0 0
    %907 = vmatpush1.bf16.msra.mxu0 0
    %908 = vmatprep.subr.bf16.mxu0 0
    %909 = vmatpush1.bf16.msra.mxu0 0
    %910 = vmatprep.subr.bf16.mxu0 0
    %911 = vmatpush1.bf16.msra.mxu0 0
    %912 = vmatprep.subr.bf16.mxu0 0
    %913 = vmatpush1.bf16.msra.mxu0 0
    %914 = vmatprep.mubr.bf16.mxu0 0
    %915 = vmatmul.mubr.bf16.gmra.mrb[0].mxu0 %v880
    %v916 = vpop.f32.mrb[0].mxu0
    %v917 = vadd.f32 0.0, %v916
    %v918 = vpop.f32.mrb[0].mxu0
    %v919 = vpop.f32.mrb[0].mxu0
    %v920 = vpop.f32.mrb[0].mxu0
    %921 = vdwg.mxu0
    %v923 = vrot.slane %v917, 1
    %v924 = vrot.slane %v917, 2
    %v927 = vadd.f32 %v95, %v923
    %v928 = vadd.f32 %v98, %v924
    %v929 = vtanh.pop %v927
    %v930 = vtanh.pop %v928
    %v931 = vmul.f32 %v929, %v175
    %v932 = vmul.f32 %v930, %v175
    %v933 = vadd.f32 %v931, %v183
    %v934 = vadd.f32 %v932, %v183
    %v937 = vrot.slane %v853, 7
    %v938 = vrot.slane %v854, 7
    %v941 = vmul.f32 %v933, %v937
    %v942 = vmul.f32 %v934, %v938
    %945 = vrot.lane.b32.xlu0 %v933, 64
    %v946 = vpop.permute.xlu0 %945
    %947 = vrot.lane.b32.xlu0 %v934, 64
    %v948 = vpop.permute.xlu0 %947
    %v951 = vmul.f32 %v933, %v946
    %v952 = vmul.f32 %v934, %v948
    %955 = vrot.lane.b32.xlu0 %v951, 32
    %v956 = vpop.permute.xlu0 %955
    %957 = vrot.lane.b32.xlu0 %v952, 32
    %v958 = vpop.permute.xlu0 %957
    %v961 = vadd.f32 %v941, %v956
    %v962 = vadd.f32 %v942, %v958
    %v963 = vtanh.pop %v961
    %v964 = vtanh.pop %v962
    %967 = vrot.lane.b32.xlu0 %v963, 64
    %v968 = vpop.permute.xlu0 %967
    %969 = vrot.lane.b32.xlu0 %v964, 64
    %v970 = vpop.permute.xlu0 %969
    %v973 = vmul.f32 %v933, %v968
    %v974 = vmul.f32 %v934, %v970
    %v977 = vrot.slane %v220, 7
    %v978 = vsel %vm228, %v977, %v219
    %979 = vrot.lane.b32.xlu0 %v978, 32
    %v980 = vpop.permute.xlu0 %979
    %v984 = vrot.slane %v326, 1
    %v985 = vsel %vm228, %v327, %v984
    %986 = vrot.lane.b32.xlu0 %v985, 64
    %v987 = vpop.permute.xlu0 %986
    %v991 = vrot.slane %v433, 2
    %v992 = vrot.slane %v434, 1
    %v993 = vsel %vm228, %v992, %v991
    %994 = vrot.lane.b32.xlu0 %v993, 96
    %v995 = vpop.permute.xlu0 %994
    %v999 = vrot.slane %v541, 3
    %v1000 = vrot.slane %v542, 2
    %v1001 = vsel %vm228, %v1000, %v999
    %v1005 = vrot.slane %v649, 4
    %v1006 = vrot.slane %v650, 3
    %v1007 = vsel %vm228, %v1006, %v1005
    %1008 = vrot.lane.b32.xlu0 %v1007, 32
    %v1009 = vpop.permute.xlu0 %1008
    %v1013 = vrot.slane %v757, 5
    %v1014 = vrot.slane %v758, 4
    %v1015 = vsel %vm228, %v1014, %v1013
    %1016 = vrot.lane.b32.xlu0 %v1015, 64
    %v1017 = vpop.permute.xlu0 %1016
    %v1021 = vrot.slane %v865, 6
    %v1022 = vrot.slane %v866, 5
    %v1023 = vsel %vm228, %v1022, %v1021
    %1024 = vrot.lane.b32.xlu0 %v1023, 96
    %v1025 = vpop.permute.xlu0 %1024
    %v1029 = vrot.slane %v973, 7
    %v1030 = vrot.slane %v974, 6
    %v1031 = vsel %vm228, %v1030, %v1029
    %v1033 = vsel %vm119, %v980, %v987
    %vm1034 = vcmask 523264
    %v1035 = vsel %vm1034, %v1033, %v995
    %vm1036 = vcmask 785408
    %v1037 = vsel %vm1036, %v1035, %v1001
    %v1038 = vsel %vm119, %v1009, %v1017
    %v1039 = vsel %vm1034, %v1038, %v1025
    %v1040 = vsel %vm1036, %v1039, %v1031
    %v1043 = vcombine.low %v1037, %v1040
    %v1045 = vunpack.c.l.s4 1983009808
    %v1046 = vunpack.c.0.s8 %v1045
    %v1047 = vlaneseq
    %v1048 = vshrl.u32 %v1047, 7
    %v1049 = vsub.s32 %v1046, %v1048
    %v1050 = vrot.slane %v1043, %v1049
    %1052 = vst [vmem:[%s6] sm:$0xf] %v1050
    // Predicated region
    $region30: #{forward.1} parent=1 // pred_check
      _
    $region31: #{forward.1} parent=1 // pred_check_branch
      %1054 = sbr.rel (0) target = $region33
    $region32: #{forward.1} parent=1 // pred_region
      _
    $region33: #{forward.1} parent=1 // pred_fallthru
      _
    // Predicated region
    $region34: #{forward.1} parent=1 // pred_check
      _
    $region35: #{forward.1} parent=1 // pred_check_branch
      %1056 = sbr.rel (0) target = $region37
    $region36: #{forward.1} parent=1 // pred_region
      _
    $region37: #{forward.1} parent=1 // pred_fallthru
      _
    %1057 = vsyncpa [#allocation3], 1

</llo_original>
